<compile_context>
chip_gen: v7x
topology: tpu7x:2x2x1
jax: 0.10.0
libtpu: 0.0.40
codegen_flags: <defaults>
</compile_context>

<pallas_src>
import jax
import jax.numpy as jnp
import numpy as np
from jax.experimental import pallas as pl
from jax.experimental.pallas import tpu as pltpu


# --------------------------------------------------------------------------- #
# Kernels
# --------------------------------------------------------------------------- #
def conv_relu_gemm_kernel_single(p_ref, w_ref, b_ref, o_ref):
    """Single-K-step path: (tm, Kp) x (Kp, Cout) + bias, ReLU, bf16 store."""
    acc = jnp.dot(p_ref[...], w_ref[...], preferred_element_type=jnp.float32)
    acc = acc + b_ref[...]                       # f32 bias add (VPU)
    o_ref[...] = jnp.maximum(acc, 0.0).astype(o_ref.dtype)


def conv_relu_gemm_kernel_ktiled(p_ref, w_ref, b_ref, o_ref, acc_ref):
    """K-tiled path: K is the trailing 'arbitrary' grid axis, f32 accumulator."""
    k = pl.program_id(1)

    @pl.when(k == 0)
    def _init():
        acc_ref[...] = jnp.zeros_like(acc_ref)

    acc_ref[...] += jnp.dot(p_ref[...], w_ref[...],
                            preferred_element_type=jnp.float32)

    @pl.when(k == pl.num_programs(1) - 1)
    def _finalize():
        acc = acc_ref[...] + b_ref[...]
        o_ref[...] = jnp.maximum(acc, 0.0).astype(o_ref.dtype)


# --------------------------------------------------------------------------- #
# Host-side helpers
# --------------------------------------------------------------------------- #
def _round_up(x, m):
    return (x + m - 1) // m * m


def _cdiv(a, b):
    return -(-a // b)


def _im2col_nhwc_bf16(x_nhwc, KH, KW, stride, k_pad):
    """bf16 patch matrix; K-index order (kh, kw, cin); K padding folded into concat."""
    N, H, W, C = x_nhwc.shape
    Ho = (H - KH) // stride + 1
    Wo = (W - KW) // stride + 1
    x_bf = x_nhwc.astype(jnp.bfloat16)           # cast the SMALL input, not the 81x patches
    cols = []
    for kh in range(KH):
        for kw in range(KW):
            sl = x_bf[:, kh:kh + stride * Ho:stride, kw:kw + stride * Wo:stride, :]
            cols.append(sl.reshape(N, Ho * Wo, C))
    if k_pad > 0:
        cols.append(jnp.zeros((N, Ho * Wo, k_pad), jnp.bfloat16))
    patches = jnp.concatenate(cols, axis=-1)     # (N, Ho*Wo, Kp)
    return patches, Ho, Wo


# --------------------------------------------------------------------------- #
# ConvLayer.forward equivalent
# --------------------------------------------------------------------------- #
def conv_relu_forward(x_nchw, weight_oihw, bias, *, stride=1, tm=2048, tk=512,
                      out_dtype=jnp.bfloat16, to_nchw=False):
    """relu(conv2d(x, w, b, stride, padding=0)); returns NHWC by default."""
    N, Cin, H, W = x_nchw.shape
    Cout, _, KH, KW = weight_oihw.shape

    # ---- contraction-dim tiling (lane-aligned, K grid axis only if needed) ----
    K = KH * KW * Cin
    Kp = _round_up(K, 128)
    tk_eff = min(_round_up(tk, 128), Kp)
    Kp = _round_up(Kp, tk_eff)
    grid_k = Kp // tk_eff

    # ---- bf16 im2col with padding folded into the concatenate ----
    x_nhwc = jnp.transpose(x_nchw, (0, 2, 3, 1))
    patches, Ho, Wo = _im2col_nhwc_bf16(x_nhwc, KH, KW, stride, Kp - K)
    M = N * Ho * Wo
    patches = patches.reshape(M, Kp)

    # ---- M tiling: 128-granular; split so v7x's two TCs both get work ----
    if M <= 256:
        tm_eff = _round_up(M, 8)                 # tiny problem: single minimal tile
    else:
        tm_eff = min(_round_up(tm, 128), _round_up(M, 128))
        if _round_up(M, 128) <= tm_eff:          # one tile would cover all of M
            tm_eff = max(128, _round_up(_cdiv(M, 2), 128))
    Mp = _round_up(M, tm_eff)
    grid_m = Mp // tm_eff

    patches_p = jnp.pad(patches, ((0, Mp - M), (0, 0)))   # bf16 row pad only

    # OIHW -> (K, Cout); K order (kh, kw, cin) matches the im2col ordering.
    w_flat = jnp.transpose(weight_oihw, (2, 3, 1, 0)).reshape(K, Cout)
    w_p = jnp.pad(w_flat.astype(jnp.bfloat16), ((0, Kp - K), (0, 0)))
    b2 = bias.reshape(1, Cout).astype(jnp.float32)

    out_bytes = jnp.dtype(out_dtype).itemsize

    # ---- VMEM budget: actual double-buffered footprint, capped for v7x ----
    footprint = (2 * tm_eff * tk_eff * 2         # patches tiles (bf16)
                 + 2 * tk_eff * Cout * 2         # weight tiles  (bf16)
                 + 2 * tm_eff * Cout * out_bytes # output tiles
                 + 2 * Cout * 4                  # bias
                 + (tm_eff * Cout * 4 if grid_k > 1 else 0))
    vmem_limit = int(min(max(2 * footprint, 32 * 1024 * 1024), 48 * 1024 * 1024))

    cost = pl.CostEstimate(
        flops=2 * Mp * Kp * Cout,
        transcendentals=0,
        bytes_accessed=(Mp * Kp * 2 + grid_m * Kp * Cout * 2
                        + Mp * Cout * out_bytes + Cout * 4),
    )

    if grid_k == 1:
        # Fast path: no accumulator, no init/finalize branches.
        out = pl.pallas_call(
            conv_relu_gemm_kernel_single,
            out_shape=jax.ShapeDtypeStruct((Mp, Cout), out_dtype),
            grid_spec=pltpu.PrefetchScalarGridSpec(
                num_scalar_prefetch=0,
                grid=(grid_m,),
                in_specs=[
                    pl.BlockSpec((tm_eff, tk_eff), lambda i: (i, 0)),
                    pl.BlockSpec((tk_eff, Cout), lambda i: (0, 0)),
                    pl.BlockSpec((1, Cout), lambda i: (0, 0)),
                ],
                out_specs=pl.BlockSpec((tm_eff, Cout), lambda i: (i, 0)),
            ),
            compiler_params=pltpu.CompilerParams(
                dimension_semantics=("parallel",),
                vmem_limit_bytes=vmem_limit,
            ),
            cost_estimate=cost,
        )(patches_p, w_p, b2)
    else:
        # K-tiled path (PrimaryCaps-sized contractions): f32 VMEM accumulator.
        out = pl.pallas_call(
            conv_relu_gemm_kernel_ktiled,
            out_shape=jax.ShapeDtypeStruct((Mp, Cout), out_dtype),
            grid_spec=pltpu.PrefetchScalarGridSpec(
                num_scalar_prefetch=0,
                grid=(grid_m, grid_k),
                in_specs=[
                    pl.BlockSpec((tm_eff, tk_eff), lambda i, k: (i, k)),
                    pl.BlockSpec((tk_eff, Cout), lambda i, k: (k, 0)),
                    pl.BlockSpec((1, Cout), lambda i, k: (0, 0)),
                ],
                out_specs=pl.BlockSpec((tm_eff, Cout), lambda i, k: (i, 0)),
                scratch_shapes=[pltpu.VMEM((tm_eff, Cout), jnp.float32)],
            ),
            compiler_params=pltpu.CompilerParams(
                dimension_semantics=("parallel", "arbitrary"),
                vmem_limit_bytes=vmem_limit,
            ),
            cost_estimate=cost,
        )(patches_p, w_p, b2)

    out = out[:M].reshape(N, Ho, Wo, Cout)       # drop padded rows (relu(bias) garbage)
    if to_nchw:
        out = jnp.transpose(out, (0, 3, 1, 2))   # only if PyTorch layout parity is needed
    return out


# --------------------------------------------------------------------------- #
# Self-test
# --------------------------------------------------------------------------- #
def _reference_nhwc(x, w, b, stride):
    """XLA conv on the same bf16-quantized operands, f32 accumulation, NHWC out."""
    x_q = x.astype(jnp.bfloat16).astype(jnp.float32)
    w_q = w.astype(jnp.bfloat16).astype(jnp.float32)
    ref = jax.lax.conv_general_dilated(
        x_q, w_q, window_strides=(stride, stride), padding="VALID",
        dimension_numbers=("NCHW", "OIHW", "NCHW"),
        precision=jax.lax.Precision.HIGHEST)
    ref = jnp.maximum(ref + b[None, :, None, None], 0.0)
    return jnp.transpose(ref, (0, 2, 3, 1))


if __name__ == "__main__":
    key = jax.random.PRNGKey(0)
    kx, kw, kb = jax.random.split(key, 3)

    fwd = jax.jit(conv_relu_forward,
                  static_argnames=("stride", "tm", "tk", "out_dtype", "to_nchw"))

    # --- Test 1: module defaults (in=1, out=256, k=9, stride=1); single-K path ---
    N, Cin, H, W = 2, 1, 16, 16
    Cout, KH = 256, 9
    x = jax.random.normal(kx, (N, Cin, H, W), dtype=jnp.float32)
    fan_in = Cin * KH * KH
    bound = 1.0 / float(np.sqrt(fan_in))
    weight = jax.random.uniform(kw, (Cout, Cin, KH, KH), jnp.float32, -bound, bound)
    bias = jax.random.uniform(kb, (Cout,), jnp.float32, -bound, bound)

    out = jax.block_until_ready(fwd(x, weight, bias))
    assert out.shape == (N, H - KH + 1, W - KH + 1, Cout)
    ref = _reference_nhwc(x, weight, bias, 1)
    np.testing.assert_allclose(np.asarray(out.astype(jnp.float32)),
                               np.asarray(ref), rtol=2e-2, atol=2e-2)

    # --- Test 2: K-tiled accumulator path (Cin=4 -> K=324 -> 3 K-steps at tk=128) ---
    Cin2, Cout2 = 4, 128
    x2 = jax.random.normal(kx, (N, Cin2, H, W), dtype=jnp.float32)
    bound2 = 1.0 / float(np.sqrt(Cin2 * KH * KH))
    w2 = jax.random.uniform(kw, (Cout2, Cin2, KH, KH), jnp.float32, -bound2, bound2)
    b2 = jax.random.uniform(kb, (Cout2,), jnp.float32, -bound2, bound2)

    out2 = jax.block_until_ready(fwd(x2, w2, b2, tk=128))
    ref2 = _reference_nhwc(x2, w2, b2, 1)
    np.testing.assert_allclose(np.asarray(out2.astype(jnp.float32)),
                               np.asarray(ref2), rtol=2e-2, atol=2e-2)

    print("KERNEL_OK")
</pallas_src>

<mosaic_0001>
module attributes {stable_mosaic.version = 11 : i64} {
  func.func @conv_relu_gemm_kernel_single(%arg0: i32, %arg1: memref<128x128xbf16, #tpu.memory_space<vmem>>, %arg2: memref<128x256xbf16, #tpu.memory_space<vmem>>, %arg3: memref<1x256xf32, #tpu.memory_space<vmem>>, %arg4: memref<128x256xbf16, #tpu.memory_space<vmem>>) attributes {dimension_semantics = [#tpu.dimension_semantics<parallel>], iteration_bounds = array<i64: 1>, scalar_prefetch = 0 : i64, scratch_operands = 0 : i64, tpu.core_type = #tpu.core_type<tc>, window_params = [{transform_indices = @transform_0, window_bounds = array<i64: 128, 128>}, {pipeline_mode = #tpu.pipeline_mode<synchronous>, transform_indices = @transform_1, window_bounds = array<i64: 128, 256>}, {pipeline_mode = #tpu.pipeline_mode<synchronous>, transform_indices = @transform_2, window_bounds = array<i64: 1, 256>}, {transform_indices = @transform_3, window_bounds = array<i64: 128, 256>}]} {
    %c0 = arith.constant 0 : index
    %c0_0 = arith.constant 0 : index
    %0 = vector.load %arg1[%c0, %c0_0] : memref<128x128xbf16, #tpu.memory_space<vmem>>, vector<128x128xbf16>
    %c0_1 = arith.constant 0 : index
    %c0_2 = arith.constant 0 : index
    %1 = vector.load %arg2[%c0_1, %c0_2] : memref<128x256xbf16, #tpu.memory_space<vmem>>, vector<128x256xbf16>
    %cst = arith.constant dense<0.000000e+00> : vector<128x256xf32>
    %2 = tpu.matmul %0, %1, %cst {dimension_numbers = #tpu.dot_dimension_numbers<[1], [0], [0], [1], [0, 0, 1, 1], [], []>} : vector<128x128xbf16>, vector<128x256xbf16>, vector<128x256xf32> -> vector<128x256xf32>
    %c0_3 = arith.constant 0 : index
    %c0_4 = arith.constant 0 : index
    %3 = vector.load %arg3[%c0_3, %c0_4] : memref<1x256xf32, #tpu.memory_space<vmem>>, vector<1x256xf32>
    %4 = vector.broadcast %3 : vector<1x256xf32> to vector<128x256xf32>
    %5 = arith.addf %2, %4 : vector<128x256xf32>
    %cst_5 = arith.constant 0.000000e+00 : f32
    %6 = vector.broadcast %cst_5 : f32 to vector<128x256xf32>
    %7 = arith.maximumf %5, %6 : vector<128x256xf32>
    %8 = arith.truncf %7 : vector<128x256xf32> to vector<128x256xbf16>
    %c0_6 = arith.constant 0 : index
    %c0_7 = arith.constant 0 : index
    %9 = vector.load %arg4[%c0_6, %c0_7] : memref<128x256xbf16, #tpu.memory_space<vmem>>, vector<128x256xbf16>
    tpu.vector_store %arg4[%c0_6, %c0_7], %8 {strides = array<i32>} : memref<128x256xbf16, #tpu.memory_space<vmem>>, vector<128x256xbf16>,
    return
  }
  func.func @transform_0(%arg0: i32) -> (i32, i32) {
    %c0_i32 = arith.constant 0 : i32
    %c0_i32_0 = arith.constant 0 : i32
    return %arg0, %c0_i32 : i32, i32
  }
  func.func @transform_1(%arg0: i32) -> (i32, i32) {
    %c0_i32 = arith.constant 0 : i32
    %c0_i32_0 = arith.constant 0 : i32
    %c0_i32_1 = arith.constant 0 : i32
    return %c0_i32, %c0_i32_0 : i32, i32
  }
  func.func @transform_2(%arg0: i32) -> (i32, i32) {
    %c0_i32 = arith.constant 0 : i32
    %c0_i32_0 = arith.constant 0 : i32
    %c0_i32_1 = arith.constant 0 : i32
    return %c0_i32, %c0_i32_0 : i32, i32
  }
  func.func @transform_3(%arg0: i32) -> (i32, i32) {
    %c0_i32 = arith.constant 0 : i32
    %c0_i32_0 = arith.constant 0 : i32
    return %arg0, %c0_i32 : i32, i32
  }
}

</mosaic_0001>

<llo_original>
// kernel: conv_relu_forward.1
$region0: #{conv_relu_forward.1}
  #allocation0 [shape = 'u32[]', space=smem, size = 0x4, offset = 0x4, fixed_abs, tag = 'smem constant byte address 0x4 - core index']
  #allocation1 [shape = 'u32[144,128]{1,0:T(1,128)}', space=vmem, size = 0x12000, scoped, tag = 'internal scratch']
  %s0 = inlined_call_operand.vmem [shape: bf16[128,128], index: 0, kind: input, shape index: {}]
  %s1 = inlined_call_operand.vmem [shape: bf16[128,256], index: 1, kind: input, shape index: {}]
  %s2 = inlined_call_operand.vmem [shape: f32[1,256], index: 2, kind: input, shape index: {}]
  %s3 = inlined_call_operand.hbm [shape: bf16[128,256], index: 3, kind: output, shape index: {}]
  %s4 = sld [smem:[#allocation0]]
  $region22: #{conv_relu_forward.1} parent=0
    _
  %s6 = ssub.s32 1, %s4
  %s7 = scalar_select 0, %s6, %s4
  $region1: #{conv_relu_forward.1} parent=0
    #allocation2 [shape = 'u8[65536]{0}', space=vmem, size = 0x10000, scoped, tag = 'output window, operand 0, single buffered']
    #allocation3 [shape = 's32[1]{0}', space=sflag, size = 0x4, scoped, tag = 'scoped memory for conv_relu_forward.1']
    %8 = vsyncpa [#allocation3], 0
    // Predicated region
    $region2: #{conv_relu_forward.1} parent=1 // pred_check
      _
    $region3: #{conv_relu_forward.1} parent=1 // pred_check_branch
      %10 = sbr.rel (0) target = $region5
    $region4: #{conv_relu_forward.1} parent=1 // pred_region
      _
    $region5: #{conv_relu_forward.1} parent=1 // pred_fallthru
      _
    // Predicated region
    $region6: #{conv_relu_forward.1} parent=1 // pred_check
      _
    $region7: #{conv_relu_forward.1} parent=1 // pred_check_branch
      %12 = sbr.rel (0) target = $region9
    $region8: #{conv_relu_forward.1} parent=1 // pred_region
      _
    $region9: #{conv_relu_forward.1} parent=1 // pred_fallthru
      _
    // Predicated region
    $region10: #{conv_relu_forward.1} parent=1 // pred_check
      _
    $region11: #{conv_relu_forward.1} parent=1 // pred_check_branch
      %14 = sbr.rel (0) target = $region13
    $region12: #{conv_relu_forward.1} parent=1 // pred_region
      _
    $region13: #{conv_relu_forward.1} parent=1 // pred_fallthru
      _
    %v16 = vld [vmem:[%s0] sm:$0xf]
    %v17 = vld [vmem:[%s0 + $0x4] sm:$0xf]
    %v18 = vld [vmem:[%s0 + $0x8] sm:$0xf]
    %v19 = vld [vmem:[%s0 + $0xc] sm:$0xf]
    %v20 = vld [vmem:[%s0 + $0x10] sm:$0xf]
    %v21 = vld [vmem:[%s0 + $0x14] sm:$0xf]
    %v22 = vld [vmem:[%s0 + $0x18] sm:$0xf]
    %v23 = vld [vmem:[%s0 + $0x1c] sm:$0xf]
    %v24 = vld [vmem:[%s0 + $0x20] sm:$0xf]
    %v25 = vld [vmem:[%s0 + $0x24] sm:$0xf]
    %v26 = vld [vmem:[%s0 + $0x28] sm:$0xf]
    %v27 = vld [vmem:[%s0 + $0x2c] sm:$0xf]
    %v28 = vld [vmem:[%s0 + $0x30] sm:$0xf]
    %v29 = vld [vmem:[%s0 + $0x34] sm:$0xf]
    %v30 = vld [vmem:[%s0 + $0x38] sm:$0xf]
    %v31 = vld [vmem:[%s0 + $0x3c] sm:$0xf]
    %v32 = vld [vmem:[%s1] sm:$0xff]
    %v33 = vld [vmem:[%s1 + $0x8] sm:$0xff]
    %v34 = vld [vmem:[%s1 + $0x10] sm:$0xff]
    %v35 = vld [vmem:[%s1 + $0x18] sm:$0xff]
    %v36 = vld [vmem:[%s1 + $0x20] sm:$0xff]
    %v37 = vld [vmem:[%s1 + $0x28] sm:$0xff]
    %v38 = vld [vmem:[%s1 + $0x30] sm:$0xff]
    %v39 = vld [vmem:[%s1 + $0x38] sm:$0xff]
    %v40 = vld [vmem:[%s1 + $0x40] sm:$0xff]
    %v41 = vld [vmem:[%s1 + $0x48] sm:$0xff]
    %v42 = vld [vmem:[%s1 + $0x50] sm:$0xff]
    %v43 = vld [vmem:[%s1 + $0x58] sm:$0xff]
    %v44 = vld [vmem:[%s1 + $0x60] sm:$0xff]
    %v45 = vld [vmem:[%s1 + $0x68] sm:$0xff]
    %v46 = vld [vmem:[%s1 + $0x70] sm:$0xff]
    %v47 = vld [vmem:[%s1 + $0x78] sm:$0xff]
    %v48 = vld [vmem:[%s2] sm:$0x3]
    %v50 = vlaneseq
    %v51 = vshrl.u32 %v50, 7
    %v52 = vsub.s32 0, %v51
    %v53 = vrot.slane %v48, %v52
    %v54 = vlaneseq
    %v55 = vshrl.u32 %v54, 7
    %v56 = vsub.s32 1, %v55
    %v57 = vrot.slane %v48, %v56
    %v76 = vunpack.c.l.b16 %v16
    %v77 = vunpack.c.l.b16 %v17
    %v78 = vunpack.c.l.b16 %v18
    %v79 = vunpack.c.l.b16 %v19
    %v80 = vunpack.c.l.b16 %v20
    %v81 = vunpack.c.l.b16 %v21
    %v82 = vunpack.c.l.b16 %v22
    %v83 = vunpack.c.l.b16 %v23
    %v84 = vunpack.c.l.b16 %v24
    %v85 = vunpack.c.l.b16 %v25
    %v86 = vunpack.c.l.b16 %v26
    %v87 = vunpack.c.l.b16 %v27
    %v88 = vunpack.c.l.b16 %v28
    %v89 = vunpack.c.l.b16 %v29
    %v90 = vunpack.c.l.b16 %v30
    %v91 = vunpack.c.l.b16 %v31
    %v92 = vpack.c.b16 %v77, %v76
    %v93 = vpack.c.b16 %v79, %v78
    %v94 = vpack.c.b16 %v81, %v80
    %v95 = vpack.c.b16 %v83, %v82
    %v96 = vpack.c.b16 %v85, %v84
    %v97 = vpack.c.b16 %v87, %v86
    %v98 = vpack.c.b16 %v89, %v88
    %v99 = vpack.c.b16 %v91, %v90
    %v124 = vunpack.c.l.b16 %v32
    %v125 = vunpack.c.h.b16 %v32
    %v126 = vunpack.c.l.b16 %v33
    %v127 = vunpack.c.h.b16 %v33
    %v128 = vunpack.c.l.b16 %v34
    %v129 = vunpack.c.h.b16 %v34
    %v130 = vunpack.c.l.b16 %v35
    %v131 = vunpack.c.h.b16 %v35
    %v132 = vunpack.c.l.b16 %v36
    %v133 = vunpack.c.h.b16 %v36
    %v134 = vunpack.c.l.b16 %v37
    %v135 = vunpack.c.h.b16 %v37
    %v136 = vunpack.c.l.b16 %v38
    %v137 = vunpack.c.h.b16 %v38
    %v138 = vunpack.c.l.b16 %v39
    %v139 = vunpack.c.h.b16 %v39
    %v140 = vunpack.c.l.b16 %v40
    %v141 = vunpack.c.h.b16 %v40
    %v142 = vunpack.c.l.b16 %v41
    %v143 = vunpack.c.h.b16 %v41
    %v144 = vunpack.c.l.b16 %v42
    %v145 = vunpack.c.h.b16 %v42
    %v146 = vunpack.c.l.b16 %v43
    %v147 = vunpack.c.h.b16 %v43
    %v148 = vunpack.c.l.b16 %v44
    %v149 = vunpack.c.h.b16 %v44
    %v150 = vunpack.c.l.b16 %v45
    %v151 = vunpack.c.h.b16 %v45
    %v152 = vunpack.c.l.b16 %v46
    %v153 = vunpack.c.h.b16 %v46
    %v154 = vunpack.c.l.b16 %v47
    %v155 = vunpack.c.h.b16 %v47
    %v156 = vpack.c.b16 %v126, %v124
    %v157 = vpack.c.b16 %v127, %v125
    %v158 = vpack.c.b16 %v130, %v128
    %v159 = vpack.c.b16 %v131, %v129
    %v160 = vpack.c.b16 %v134, %v132
    %v161 = vpack.c.b16 %v135, %v133
    %v162 = vpack.c.b16 %v138, %v136
    %v163 = vpack.c.b16 %v139, %v137
    %v164 = vpack.c.b16 %v142, %v140
    %v165 = vpack.c.b16 %v143, %v141
    %v166 = vpack.c.b16 %v146, %v144
    %v167 = vpack.c.b16 %v147, %v145
    %v168 = vpack.c.b16 %v150, %v148
    %v169 = vpack.c.b16 %v151, %v149
    %v170 = vpack.c.b16 %v154, %v152
    %v171 = vpack.c.b16 %v155, %v153
    %188 = vmatprep.subr.bf16.mxu0 %v157
    %189 = vmatpush1.bf16.msra.mxu0 %v156
    %190 = vmatprep.subr.bf16.mxu0 %v159
    %191 = vmatpush1.bf16.msra.mxu0 %v158
    %192 = vmatprep.subr.bf16.mxu0 %v161
    %193 = vmatpush1.bf16.msra.mxu0 %v160
    %194 = vmatprep.subr.bf16.mxu0 %v163
    %195 = vmatpush1.bf16.msra.mxu0 %v162
    %196 = vmatprep.subr.bf16.mxu0 %v165
    %197 = vmatpush1.bf16.msra.mxu0 %v164
    %198 = vmatprep.subr.bf16.mxu0 %v167
    %199 = vmatpush1.bf16.msra.mxu0 %v166
    %200 = vmatprep.subr.bf16.mxu0 %v169
    %201 = vmatpush1.bf16.msra.mxu0 %v168
    %202 = vmatprep.subr.bf16.mxu0 %v171
    %203 = vmatpush1.bf16.msra.mxu0 %v170
    %204 = vmatprep.subr.bf16.mxu0 0
    %205 = vmatpush1.bf16.msra.mxu0 0
    %206 = vmatprep.subr.bf16.mxu0 0
    %207 = vmatpush1.bf16.msra.mxu0 0
    %208 = vmatprep.subr.bf16.mxu0 0
    %209 = vmatpush1.bf16.msra.mxu0 0
    %210 = vmatprep.subr.bf16.mxu0 0
    %211 = vmatpush1.bf16.msra.mxu0 0
    %212 = vmatprep.subr.bf16.mxu0 0
    %213 = vmatpush1.bf16.msra.mxu0 0
    %214 = vmatprep.subr.bf16.mxu0 0
    %215 = vmatpush1.bf16.msra.mxu0 0
    %216 = vmatprep.subr.bf16.mxu0 0
    %217 = vmatpush1.bf16.msra.mxu0 0
    %218 = vmatprep.subr.bf16.mxu0 0
    %219 = vmatpush1.bf16.msra.mxu0 0
    %220 = vmatprep.mubr.bf16.mxu0 0
    %221 = vmatmul.mubr.bf16.gmra.mrb[0].mxu0 %v92
    %v222 = vpop.f32.mrb[0].mxu0
    %v223 = vadd.f32 %v53, %v222
    %v224 = vpop.f32.mrb[0].mxu0
    %v225 = vadd.f32 %v57, %v224
    %v226 = vpop.f32.mrb[0].mxu0
    %v227 = vadd.f32 %v53, %v226
    %v228 = vpop.f32.mrb[0].mxu0
    %v229 = vadd.f32 %v57, %v228
    %230 = vmatprep.mubr.bf16.mxu0 0
    %231 = vmatmul.mubr.bf16.gmra.mrb[0].mxu0 %v93
    %v232 = vpop.f32.mrb[0].mxu0
    %v233 = vadd.f32 %v53, %v232
    %v234 = vpop.f32.mrb[0].mxu0
    %v235 = vadd.f32 %v57, %v234
    %v236 = vpop.f32.mrb[0].mxu0
    %v237 = vadd.f32 %v53, %v236
    %v238 = vpop.f32.mrb[0].mxu0
    %v239 = vadd.f32 %v57, %v238
    %240 = vmatprep.mubr.bf16.mxu0 0
    %241 = vmatmul.mubr.bf16.gmra.mrb[0].mxu0 %v94
    %v242 = vpop.f32.mrb[0].mxu0
    %v243 = vadd.f32 %v53, %v242
    %v244 = vpop.f32.mrb[0].mxu0
    %v245 = vadd.f32 %v57, %v244
    %v246 = vpop.f32.mrb[0].mxu0
    %v247 = vadd.f32 %v53, %v246
    %v248 = vpop.f32.mrb[0].mxu0
    %v249 = vadd.f32 %v57, %v248
    %250 = vmatprep.mubr.bf16.mxu0 0
    %251 = vmatmul.mubr.bf16.gmra.mrb[0].mxu0 %v95
    %v252 = vpop.f32.mrb[0].mxu0
    %v253 = vadd.f32 %v53, %v252
    %v254 = vpop.f32.mrb[0].mxu0
    %v255 = vadd.f32 %v57, %v254
    %v256 = vpop.f32.mrb[0].mxu0
    %v257 = vadd.f32 %v53, %v256
    %v258 = vpop.f32.mrb[0].mxu0
    %v259 = vadd.f32 %v57, %v258
    %260 = vmatprep.mubr.bf16.mxu0 0
    %261 = vmatmul.mubr.bf16.gmra.mrb[0].mxu0 %v96
    %v262 = vpop.f32.mrb[0].mxu0
    %v263 = vadd.f32 %v53, %v262
    %v264 = vpop.f32.mrb[0].mxu0
    %v265 = vadd.f32 %v57, %v264
    %v266 = vpop.f32.mrb[0].mxu0
    %v267 = vadd.f32 %v53, %v266
    %v268 = vpop.f32.mrb[0].mxu0
    %v269 = vadd.f32 %v57, %v268
    %270 = vmatprep.mubr.bf16.mxu0 0
    %271 = vmatmul.mubr.bf16.gmra.mrb[0].mxu0 %v97
    %v272 = vpop.f32.mrb[0].mxu0
    %v273 = vadd.f32 %v53, %v272
    %v274 = vpop.f32.mrb[0].mxu0
    %v275 = vadd.f32 %v57, %v274
    %v276 = vpop.f32.mrb[0].mxu0
    %v277 = vadd.f32 %v53, %v276
    %v278 = vpop.f32.mrb[0].mxu0
    %v279 = vadd.f32 %v57, %v278
    %280 = vmatprep.mubr.bf16.mxu0 0
    %281 = vmatmul.mubr.bf16.gmra.mrb[0].mxu0 %v98
    %v282 = vpop.f32.mrb[0].mxu0
    %v283 = vadd.f32 %v53, %v282
    %v284 = vpop.f32.mrb[0].mxu0
    %v285 = vadd.f32 %v57, %v284
    %v286 = vpop.f32.mrb[0].mxu0
    %v287 = vadd.f32 %v53, %v286
    %v288 = vpop.f32.mrb[0].mxu0
    %v289 = vadd.f32 %v57, %v288
    %290 = vmatprep.mubr.bf16.mxu0 0
    %291 = vmatmul.mubr.bf16.gmra.mrb[0].mxu0 %v99
    %v292 = vpop.f32.mrb[0].mxu0
    %v293 = vadd.f32 %v53, %v292
    %v294 = vpop.f32.mrb[0].mxu0
    %v295 = vadd.f32 %v57, %v294
    %v296 = vpop.f32.mrb[0].mxu0
    %v297 = vadd.f32 %v53, %v296
    %v298 = vpop.f32.mrb[0].mxu0
    %v299 = vadd.f32 %v57, %v298
    %300 = vdwg.mxu0
    %v301 = vmax.f32 %v223, 0.0
    %v302 = vmax.f32 %v225, 0.0
    %v303 = vmax.f32 %v227, 0.0
    %v304 = vmax.f32 %v229, 0.0
    %v305 = vmax.f32 %v233, 0.0
    %v306 = vmax.f32 %v235, 0.0
    %v307 = vmax.f32 %v237, 0.0
    %v308 = vmax.f32 %v239, 0.0
    %v309 = vmax.f32 %v243, 0.0
    %v310 = vmax.f32 %v245, 0.0
    %v311 = vmax.f32 %v247, 0.0
    %v312 = vmax.f32 %v249, 0.0
    %v313 = vmax.f32 %v253, 0.0
    %v314 = vmax.f32 %v255, 0.0
    %v315 = vmax.f32 %v257, 0.0
    %v316 = vmax.f32 %v259, 0.0
    %v317 = vmax.f32 %v263, 0.0
    %v318 = vmax.f32 %v265, 0.0
    %v319 = vmax.f32 %v267, 0.0
    %v320 = vmax.f32 %v269, 0.0
    %v321 = vmax.f32 %v273, 0.0
    %v322 = vmax.f32 %v275, 0.0
    %v323 = vmax.f32 %v277, 0.0
    %v324 = vmax.f32 %v279, 0.0
    %v325 = vmax.f32 %v283, 0.0
    %v326 = vmax.f32 %v285, 0.0
    %v327 = vmax.f32 %v287, 0.0
    %v328 = vmax.f32 %v289, 0.0
    %v329 = vmax.f32 %v293, 0.0
    %v330 = vmax.f32 %v295, 0.0
    %v331 = vmax.f32 %v297, 0.0
    %v332 = vmax.f32 %v299, 0.0
    %v333 = vpack.c.bf16 %v303, %v301
    %v334 = vpack.c.bf16 %v304, %v302
    %v335 = vpack.c.bf16 %v307, %v305
    %v336 = vpack.c.bf16 %v308, %v306
    %v337 = vpack.c.bf16 %v311, %v309
    %v338 = vpack.c.bf16 %v312, %v310
    %v339 = vpack.c.bf16 %v315, %v313
    %v340 = vpack.c.bf16 %v316, %v314
    %v341 = vpack.c.bf16 %v319, %v317
    %v342 = vpack.c.bf16 %v320, %v318
    %v343 = vpack.c.bf16 %v323, %v321
    %v344 = vpack.c.bf16 %v324, %v322
    %v345 = vpack.c.bf16 %v327, %v325
    %v346 = vpack.c.bf16 %v328, %v326
    %v347 = vpack.c.bf16 %v331, %v329
    %v348 = vpack.c.bf16 %v332, %v330
    %v365 = vunpack.c.l.b16 %v333
    %v366 = vunpack.c.l.b16 %v334
    %v367 = vunpack.c.h.b16 %v333
    %v368 = vunpack.c.h.b16 %v334
    %v369 = vunpack.c.l.b16 %v335
    %v370 = vunpack.c.l.b16 %v336
    %v371 = vunpack.c.h.b16 %v335
    %v372 = vunpack.c.h.b16 %v336
    %v373 = vunpack.c.l.b16 %v337
    %v374 = vunpack.c.l.b16 %v338
    %v375 = vunpack.c.h.b16 %v337
    %v376 = vunpack.c.h.b16 %v338
    %v377 = vunpack.c.l.b16 %v339
    %v378 = vunpack.c.l.b16 %v340
    %v379 = vunpack.c.h.b16 %v339
    %v380 = vunpack.c.h.b16 %v340
    %v381 = vunpack.c.l.b16 %v341
    %v382 = vunpack.c.l.b16 %v342
    %v383 = vunpack.c.h.b16 %v341
    %v384 = vunpack.c.h.b16 %v342
    %v385 = vunpack.c.l.b16 %v343
    %v386 = vunpack.c.l.b16 %v344
    %v387 = vunpack.c.h.b16 %v343
    %v388 = vunpack.c.h.b16 %v344
    %v389 = vunpack.c.l.b16 %v345
    %v390 = vunpack.c.l.b16 %v346
    %v391 = vunpack.c.h.b16 %v345
    %v392 = vunpack.c.h.b16 %v346
    %v393 = vunpack.c.l.b16 %v347
    %v394 = vunpack.c.l.b16 %v348
    %v395 = vunpack.c.h.b16 %v347
    %v396 = vunpack.c.h.b16 %v348
    %v397 = vpack.c.b16 %v366, %v365
    %v398 = vpack.c.b16 %v368, %v367
    %v399 = vpack.c.b16 %v370, %v369
    %v400 = vpack.c.b16 %v372, %v371
    %v401 = vpack.c.b16 %v374, %v373
    %v402 = vpack.c.b16 %v376, %v375
    %v403 = vpack.c.b16 %v378, %v377
    %v404 = vpack.c.b16 %v380, %v379
    %v405 = vpack.c.b16 %v382, %v381
    %v406 = vpack.c.b16 %v384, %v383
    %v407 = vpack.c.b16 %v386, %v385
    %v408 = vpack.c.b16 %v388, %v387
    %v409 = vpack.c.b16 %v390, %v389
    %v410 = vpack.c.b16 %v392, %v391
    %v411 = vpack.c.b16 %v394, %v393
    %v412 = vpack.c.b16 %v396, %v395
    %429 = vst [vmem:[#allocation2] sm:$0xff] %v397
    %430 = vst [vmem:[#allocation2 + $0x8] sm:$0xff] %v398
    %431 = vst [vmem:[#allocation2 + $0x10] sm:$0xff] %v399
    %432 = vst [vmem:[#allocation2 + $0x18] sm:$0xff] %v400
    %433 = vst [vmem:[#allocation2 + $0x20] sm:$0xff] %v401
    %434 = vst [vmem:[#allocation2 + $0x28] sm:$0xff] %v402
    %435 = vst [vmem:[#allocation2 + $0x30] sm:$0xff] %v403
    %436 = vst [vmem:[#allocation2 + $0x38] sm:$0xff] %v404
    %437 = vst [vmem:[#allocation2 + $0x40] sm:$0xff] %v405
    %438 = vst [vmem:[#allocation2 + $0x48] sm:$0xff] %v406
    %439 = vst [vmem:[#allocation2 + $0x50] sm:$0xff] %v407
    %440 = vst [vmem:[#allocation2 + $0x58] sm:$0xff] %v408
    %441 = vst [vmem:[#allocation2 + $0x60] sm:$0xff] %v409
    %442 = vst [vmem:[#allocation2 + $0x68] sm:$0xff] %v410
    %443 = vst [vmem:[#allocation2 + $0x70] sm:$0xff] %v411
    %444 = vst [vmem:[#allocation2 + $0x78] sm:$0xff] %v412
    // Predicated region
    $region14: #{conv_relu_forward.1} parent=1 // pred_check
      _
    $region15: #{conv_relu_forward.1} parent=1 // pred_check_branch
      %446 = sbr.rel (0) target = $region17
    $region16: #{conv_relu_forward.1} parent=1 // pred_region
      %s448 = ssub.s32 2048, 2048
      %449 = vsyncadd [#allocation3], %s448
      %s450 = sshll.u32 [#allocation2], 4
      %s451 = int_to_ptr.vmem [resolvable:$true] %s450
      %456 = dma.vmem_to_hbm [thread:$0]  %s451, 2048, %s3, [#allocation3], 128, 128, 8
    $region17: #{conv_relu_forward.1} parent=1 // pred_fallthru
      _
    // Predicated region
    $region18: #{conv_relu_forward.1} parent=1 // pred_check
      _
    $region19: #{conv_relu_forward.1} parent=1 // pred_check_branch
      %458 = sbr.rel (0) target = $region21
    $region20: #{conv_relu_forward.1} parent=1 // pred_region
      %459 = dma.done [#allocation3], 2048
    $region21: #{conv_relu_forward.1} parent=1 // pred_fallthru
      _
    %460 = vsyncpa [#allocation3], 1

</llo_original>
